<compile_context>
chip_gen: v7x
topology: tpu7x:2x2x1
jax: 0.10.0
libtpu: 0.0.40
codegen_flags: <defaults>
</compile_context>

<pallas_src>
import functools

import jax
import jax.numpy as jnp
from jax.experimental import pallas as pl
from jax.experimental.pallas import tpu as pltpu

IN_F = 5
HID_F = 25
OUT_F = 2

LANES = 128
# Per-tile VMEM footprint ~256 B/element (double-buffered x/out blocks + the
# (25, tile_b) hidden intermediate) -> ~16 MiB at 65536: fits every generation
# (v7x: 64 MiB/TC physical) with headroom.
TILE_B_MAX = 65536


def _round_up(x, m):
    return (x + m - 1) // m * m


def _choose_tile_b(batch):
    # Target >= 4 grid steps once the batch is large enough (v7x megacore
    # sharding + pipeline overlap), while capping per-step VMEM footprint.
    t = _round_up(pl.cdiv(max(batch, 1), 4), LANES)
    return int(min(max(t, LANES), TILE_B_MAX))


def _mlp_kernel(xt_ref, w1t_ref, b1_ref, w2t_ref, b2_ref, ot_ref):
    # xt:  (IN_F,  tile_b)   w1t: (HID_F, IN_F)   b1: (HID_F, 1)
    # w2t: (OUT_F, HID_F)    b2:  (OUT_F, 1)      ot: (OUT_F, tile_b)
    xt = xt_ref[...]
    h = jnp.dot(w1t_ref[...], xt,
                preferred_element_type=jnp.float32,
                precision=jax.lax.Precision.HIGHEST) + b1_ref[...]
    h = jnp.maximum(h, 0.0)  # ReLU
    y = jnp.dot(w2t_ref[...], h,
                preferred_element_type=jnp.float32,
                precision=jax.lax.Precision.HIGHEST) + b2_ref[...]
    ot_ref[...] = y.astype(ot_ref.dtype)


def trajectory_neural_net_fm(xt, w1, b1, w2, b2, *, tile_b=None):
    """Feature-major forward pass (preferred, transpose-free API).

    xt: (5, B) float32 with batch on the minor (lane) axis.
    Returns (2, B) float32 == (relu(x @ w1 + b1) @ w2 + b2)^T.
    """
    b_total = xt.shape[1]
    if tile_b is None:
        tile_b = _choose_tile_b(b_total)
    num_tiles = pl.cdiv(b_total, tile_b)

    w1t = jnp.transpose(w1.astype(jnp.float32))      # (HID_F, IN_F), PyTorch layout
    w2t = jnp.transpose(w2.astype(jnp.float32))      # (OUT_F, HID_F)
    b1c = b1.astype(jnp.float32).reshape(HID_F, 1)
    b2c = b2.astype(jnp.float32).reshape(OUT_F, 1)

    resident = lambda shape: pl.BlockSpec(shape, lambda i: (0, 0))

    flops = b_total * (2 * IN_F * HID_F + 2 * HID_F * OUT_F + 2 * HID_F + OUT_F)
    bytes_accessed = 4 * (b_total * (IN_F + OUT_F)
                          + IN_F * HID_F + HID_F + HID_F * OUT_F + OUT_F)

    return pl.pallas_call(
        _mlp_kernel,
        out_shape=jax.ShapeDtypeStruct((OUT_F, b_total), jnp.float32),
        grid=(num_tiles,),
        in_specs=[
            pl.BlockSpec((IN_F, tile_b), lambda i: (0, i)),   # lane-dense x^T tile
            resident((HID_F, IN_F)),
            resident((HID_F, 1)),
            resident((OUT_F, HID_F)),
            resident((OUT_F, 1)),
        ],
        out_specs=pl.BlockSpec((OUT_F, tile_b), lambda i: (0, i)),  # lane-dense y^T
        compiler_params=pltpu.CompilerParams(
            dimension_semantics=("parallel",),
            vmem_limit_bytes=48 * 1024 * 1024,
        ),
        cost_estimate=pl.CostEstimate(
            flops=flops, transcendentals=0, bytes_accessed=bytes_accessed),
    )(xt, w1t, b1c, w2t, b2c)


@functools.partial(jax.jit, static_argnames=("tile_b",))
def trajectory_neural_net(x, w1, b1, w2, b2, *, tile_b=None):
    """PyTorch-layout forward pass: x (B, 5) -> (B, 2).

    The in/out transposes and the (at most 127-column) pad-to-128 are left to
    XLA and fused under this single jit; callers that can keep data
    feature-major should use `trajectory_neural_net_fm` directly and avoid the
    transposes entirely.
    """
    b = x.shape[0]
    b_pad = _round_up(max(b, 1), LANES)
    xt = jnp.transpose(x.astype(jnp.float32))            # (5, B)
    if b_pad != b:
        xt = jnp.pad(xt, ((0, 0), (0, b_pad - b)))        # pad only to a lane multiple
    yt = trajectory_neural_net_fm(xt, w1, b1, w2, b2, tile_b=tile_b)
    return jnp.transpose(yt[:, :b])                       # (B, 2)


def init_params(key):
    """Deterministic init mimicking PyTorch nn.Linear default (+/- 1/sqrt(fan_in))."""
    k1, k2, k3, k4 = jax.random.split(key, 4)
    bound1 = 1.0 / jnp.sqrt(jnp.float32(IN_F))
    bound2 = 1.0 / jnp.sqrt(jnp.float32(HID_F))
    # stored as (in, out), i.e. transposed relative to PyTorch's (out, in)
    w1 = jax.random.uniform(k1, (IN_F, HID_F), jnp.float32, -bound1, bound1)
    b1 = jax.random.uniform(k2, (HID_F,), jnp.float32, -bound1, bound1)
    w2 = jax.random.uniform(k3, (HID_F, OUT_F), jnp.float32, -bound2, bound2)
    b2 = jax.random.uniform(k4, (OUT_F,), jnp.float32, -bound2, bound2)
    return w1, b1, w2, b2


def _reference(x, w1, b1, w2, b2):
    return jnp.maximum(x @ w1 + b1, 0.0) @ w2 + b2


if __name__ == "__main__":
    key = jax.random.PRNGKey(0)
    kx1, kx2, kx3, kp = jax.random.split(key, 4)
    w1, b1, w2, b2 = init_params(kp)

    # Small batch (single 128-wide tile after lane padding).
    x1 = jax.random.normal(kx1, (8, IN_F), jnp.float32)
    out1 = jax.block_until_ready(trajectory_neural_net(x1, w1, b1, w2, b2))
    ref1 = _reference(x1, w1, b1, w2, b2)
    assert out1.shape == (8, OUT_F)
    assert jnp.allclose(out1, ref1, atol=1e-5, rtol=1e-5)

    # Multi-tile with a ragged (partial) last block: B=300 -> 384 padded
    # columns, tile_b=256 -> grid of 2, second block only half valid.
    x2 = jax.random.normal(kx2, (300, IN_F), jnp.float32)
    out2 = jax.block_until_ready(
        trajectory_neural_net(x2, w1, b1, w2, b2, tile_b=256))
    ref2 = _reference(x2, w1, b1, w2, b2)
    assert out2.shape == (300, OUT_F)
    assert jnp.allclose(out2, ref2, atol=1e-5, rtol=1e-5)

    # Feature-major (zero-transpose) entry point, 4 tiles via the heuristic.
    x3 = jax.random.normal(kx3, (512, IN_F), jnp.float32)
    yt3 = jax.block_until_ready(
        trajectory_neural_net_fm(jnp.transpose(x3), w1, b1, w2, b2))
    ref3 = _reference(x3, w1, b1, w2, b2)
    assert yt3.shape == (OUT_F, 512)
    assert jnp.allclose(jnp.transpose(yt3), ref3, atol=1e-5, rtol=1e-5)

    print("KERNEL_OK")
</pallas_src>

<mosaic_0001>
module attributes {stable_mosaic.version = 11 : i64} {
  func.func @_mlp_kernel(%arg0: i32, %arg1: memref<5x128xf32, #tpu.memory_space<vmem>>, %arg2: memref<25x5xf32, #tpu.memory_space<vmem>>, %arg3: memref<25x1xf32, #tpu.memory_space<vmem>>, %arg4: memref<2x25xf32, #tpu.memory_space<vmem>>, %arg5: memref<2x1xf32, #tpu.memory_space<vmem>>, %arg6: memref<2x128xf32, #tpu.memory_space<vmem>>) attributes {dimension_semantics = [#tpu.dimension_semantics<parallel>], iteration_bounds = array<i64: 1>, scalar_prefetch = 0 : i64, scratch_operands = 0 : i64, tpu.core_type = #tpu.core_type<tc>, window_params = [{transform_indices = @transform_0, window_bounds = array<i64: 5, 128>}, {pipeline_mode = #tpu.pipeline_mode<synchronous>, transform_indices = @transform_1, window_bounds = array<i64: 25, 5>}, {pipeline_mode = #tpu.pipeline_mode<synchronous>, transform_indices = @transform_2, window_bounds = array<i64: 25, 1>}, {pipeline_mode = #tpu.pipeline_mode<synchronous>, transform_indices = @transform_3, window_bounds = array<i64: 2, 25>}, {pipeline_mode = #tpu.pipeline_mode<synchronous>, transform_indices = @transform_4, window_bounds = array<i64: 2, 1>}, {transform_indices = @transform_5, window_bounds = array<i64: 2, 128>}]} {
    %c0 = arith.constant 0 : index
    %c0_0 = arith.constant 0 : index
    %0 = vector.load %arg1[%c0, %c0_0] : memref<5x128xf32, #tpu.memory_space<vmem>>, vector<5x128xf32>
    %c0_1 = arith.constant 0 : index
    %c0_2 = arith.constant 0 : index
    %1 = vector.load %arg2[%c0_1, %c0_2] : memref<25x5xf32, #tpu.memory_space<vmem>>, vector<25x5xf32>
    %cst = arith.constant dense<0.000000e+00> : vector<25x128xf32>
    %2 = tpu.matmul %1, %0, %cst {dimension_numbers = #tpu.dot_dimension_numbers<[1], [0], [0], [1], [0, 0, 1, 1], [], []>, precision = #tpu.contract_precision<fp32>} : vector<25x5xf32>, vector<5x128xf32>, vector<25x128xf32> -> vector<25x128xf32>
    %c0_3 = arith.constant 0 : index
    %c0_4 = arith.constant 0 : index
    %3 = vector.load %arg3[%c0_3, %c0_4] : memref<25x1xf32, #tpu.memory_space<vmem>>, vector<25x1xf32>
    %4 = vector.broadcast %3 : vector<25x1xf32> to vector<25x128xf32>
    %5 = arith.addf %2, %4 : vector<25x128xf32>
    %cst_5 = arith.constant 0.000000e+00 : f32
    %6 = vector.broadcast %cst_5 : f32 to vector<25x128xf32>
    %7 = arith.maximumf %5, %6 : vector<25x128xf32>
    %c0_6 = arith.constant 0 : index
    %c0_7 = arith.constant 0 : index
    %8 = vector.load %arg4[%c0_6, %c0_7] : memref<2x25xf32, #tpu.memory_space<vmem>>, vector<2x25xf32>
    %cst_8 = arith.constant dense<0.000000e+00> : vector<2x128xf32>
    %9 = tpu.matmul %8, %7, %cst_8 {dimension_numbers = #tpu.dot_dimension_numbers<[1], [0], [0], [1], [0, 0, 1, 1], [], []>, precision = #tpu.contract_precision<fp32>} : vector<2x25xf32>, vector<25x128xf32>, vector<2x128xf32> -> vector<2x128xf32>
    %c0_9 = arith.constant 0 : index
    %c0_10 = arith.constant 0 : index
    %10 = vector.load %arg5[%c0_9, %c0_10] : memref<2x1xf32, #tpu.memory_space<vmem>>, vector<2x1xf32>
    %11 = vector.broadcast %10 : vector<2x1xf32> to vector<2x128xf32>
    %12 = arith.addf %9, %11 : vector<2x128xf32>
    %c0_11 = arith.constant 0 : index
    %c0_12 = arith.constant 0 : index
    %13 = vector.load %arg6[%c0_11, %c0_12] : memref<2x128xf32, #tpu.memory_space<vmem>>, vector<2x128xf32>
    tpu.vector_store %arg6[%c0_11, %c0_12], %12 {strides = array<i32>} : memref<2x128xf32, #tpu.memory_space<vmem>>, vector<2x128xf32>,
    return
  }
  func.func @transform_0(%arg0: i32) -> (i32, i32) {
    %c0_i32 = arith.constant 0 : i32
    %c0_i32_0 = arith.constant 0 : i32
    return %c0_i32, %arg0 : i32, i32
  }
  func.func @transform_1(%arg0: i32) -> (i32, i32) {
    %c0_i32 = arith.constant 0 : i32
    %c0_i32_0 = arith.constant 0 : i32
    %c0_i32_1 = arith.constant 0 : i32
    return %c0_i32, %c0_i32_0 : i32, i32
  }
  func.func @transform_2(%arg0: i32) -> (i32, i32) {
    %c0_i32 = arith.constant 0 : i32
    %c0_i32_0 = arith.constant 0 : i32
    %c0_i32_1 = arith.constant 0 : i32
    return %c0_i32, %c0_i32_0 : i32, i32
  }
  func.func @transform_3(%arg0: i32) -> (i32, i32) {
    %c0_i32 = arith.constant 0 : i32
    %c0_i32_0 = arith.constant 0 : i32
    %c0_i32_1 = arith.constant 0 : i32
    return %c0_i32, %c0_i32_0 : i32, i32
  }
  func.func @transform_4(%arg0: i32) -> (i32, i32) {
    %c0_i32 = arith.constant 0 : i32
    %c0_i32_0 = arith.constant 0 : i32
    %c0_i32_1 = arith.constant 0 : i32
    return %c0_i32, %c0_i32_0 : i32, i32
  }
  func.func @transform_5(%arg0: i32) -> (i32, i32) {
    %c0_i32 = arith.constant 0 : i32
    %c0_i32_0 = arith.constant 0 : i32
    return %c0_i32, %arg0 : i32, i32
  }
}

</mosaic_0001>

<llo_original>
// kernel: trajectory_neural_net.1
$region0: #{trajectory_neural_net.1}
  #allocation0 [shape = 'u32[]', space=smem, size = 0x4, offset = 0x4, fixed_abs, tag = 'smem constant byte address 0x4 - core index']
  #allocation1 [shape = 'u32[144,128]{1,0:T(1,128)}', space=vmem, size = 0x12000, scoped, tag = 'internal scratch']
  %s0 = inlined_call_operand.vmem [shape: f32[5,128], index: 0, kind: input, shape index: {}]
  %s1 = inlined_call_operand.vmem [shape: f32[25,5], index: 1, kind: input, shape index: {}]
  %s2 = inlined_call_operand.vmem [shape: f32[25,1], index: 2, kind: input, shape index: {}]
  %s3 = inlined_call_operand.vmem [shape: f32[2,25], index: 3, kind: input, shape index: {}]
  %s4 = inlined_call_operand.vmem [shape: f32[2,1], index: 4, kind: input, shape index: {}]
  %s5 = inlined_call_operand.vmem [shape: f32[2,128], index: 5, kind: output, shape index: {}]
  %s6 = sld [smem:[#allocation0]]
  $region30: #{trajectory_neural_net.1} parent=0
    _
  %s8 = ssub.s32 1, %s6
  %s9 = scalar_select 0, %s8, %s6
  // Predicated region
  $region2: #{trajectory_neural_net.1} parent=0 // pred_check
    _
  $region3: #{trajectory_neural_net.1} parent=0 // pred_check_branch
    %11 = sbr.rel (0) target = $region5
  $region4: #{trajectory_neural_net.1} parent=0 // pred_region
    _
  $region5: #{trajectory_neural_net.1} parent=0 // pred_fallthru
    _
  // Predicated region
  $region6: #{trajectory_neural_net.1} parent=0 // pred_check
    _
  $region7: #{trajectory_neural_net.1} parent=0 // pred_check_branch
    %13 = sbr.rel (0) target = $region9
  $region8: #{trajectory_neural_net.1} parent=0 // pred_region
    _
  $region9: #{trajectory_neural_net.1} parent=0 // pred_fallthru
    _
  // Predicated region
  $region10: #{trajectory_neural_net.1} parent=0 // pred_check
    _
  $region11: #{trajectory_neural_net.1} parent=0 // pred_check_branch
    %15 = sbr.rel (0) target = $region13
  $region12: #{trajectory_neural_net.1} parent=0 // pred_region
    _
  $region13: #{trajectory_neural_net.1} parent=0 // pred_fallthru
    _
  // Predicated region
  $region14: #{trajectory_neural_net.1} parent=0 // pred_check
    _
  $region15: #{trajectory_neural_net.1} parent=0 // pred_check_branch
    %17 = sbr.rel (0) target = $region17
  $region16: #{trajectory_neural_net.1} parent=0 // pred_region
    _
  $region17: #{trajectory_neural_net.1} parent=0 // pred_fallthru
    _
  // Predicated region
  $region18: #{trajectory_neural_net.1} parent=0 // pred_check
    _
  $region19: #{trajectory_neural_net.1} parent=0 // pred_check_branch
    %19 = sbr.rel (0) target = $region21
  $region20: #{trajectory_neural_net.1} parent=0 // pred_region
    _
  $region21: #{trajectory_neural_net.1} parent=0 // pred_fallthru
    _
  %v20 = vld [vmem:[%s0] sm:$0x1f]
  %v21 = vld [vmem:[%s1] sm:$0xff]
  %v22 = vld [vmem:[%s1 + $0x8] sm:$0xff]
  %v23 = vld [vmem:[%s1 + $0x10] sm:$0xff]
  %v24 = vld [vmem:[%s1 + $0x18] sm:$0x1]
  %v25 = vld [vmem:[%s2] sm:$0xff]
  %v26 = vld [vmem:[%s2 + $0x8] sm:$0xff]
  %v27 = vld [vmem:[%s2 + $0x10] sm:$0xff]
  %v28 = vld [vmem:[%s2 + $0x18] sm:$0x1]
  %30 = vset.pattern.permute.xlu0 0
  %31 = vperm.xlu0 %30, %v25
  %v32 = vpop.permute.xlu0 %31
  %35 = vset.pattern.permute.xlu0 0
  %36 = vperm.xlu0 %35, %v26
  %v37 = vpop.permute.xlu0 %36
  %40 = vset.pattern.permute.xlu0 0
  %41 = vperm.xlu0 %40, %v27
  %v42 = vpop.permute.xlu0 %41
  %45 = vset.pattern.permute.xlu0 0
  %46 = vperm.xlu0 %45, %v28
  %v47 = vpop.permute.xlu0 %46
  %vm49 = vcmask 39936
  %v51 = vsel %vm49, %v21, 0
  %v54 = vsel %vm49, %v22, 0
  %v57 = vsel %vm49, %v23, 0
  %v60 = vsel %vm49, %v24, 0
  %vm62 = vcmask 1044480
  %v64 = vsel %vm62, %v20, 0
  %66 = vmatprep.subr.mxu0 0.0
  %v67 = vand.u32 %v64, 4294901760
  %68 = vmatpush1.msra.mxu0 %v67
  %69 = vmatprep.subr.mxu0 0.0
  %70 = vmatpush1.msra.mxu0 0.0
  %71 = vmatprep.subr.mxu0 0.0
  %72 = vmatpush1.msra.mxu0 0.0
  %73 = vmatprep.subr.mxu0 0.0
  %74 = vmatpush1.msra.mxu0 0.0
  %75 = vmatprep.subr.mxu0 0.0
  %76 = vmatpush1.msra.mxu0 0.0
  %77 = vmatprep.subr.mxu0 0.0
  %78 = vmatpush1.msra.mxu0 0.0
  %79 = vmatprep.subr.mxu0 0.0
  %80 = vmatpush1.msra.mxu0 0.0
  %81 = vmatprep.subr.mxu0 0.0
  %82 = vmatpush1.msra.mxu0 0.0
  %83 = vmatprep.subr.mxu0 0.0
  %84 = vmatpush1.msra.mxu0 0.0
  %85 = vmatprep.subr.mxu0 0.0
  %86 = vmatpush1.msra.mxu0 0.0
  %87 = vmatprep.subr.mxu0 0.0
  %88 = vmatpush1.msra.mxu0 0.0
  %89 = vmatprep.subr.mxu0 0.0
  %90 = vmatpush1.msra.mxu0 0.0
  %91 = vmatprep.subr.mxu0 0.0
  %92 = vmatpush1.msra.mxu0 0.0
  %93 = vmatprep.subr.mxu0 0.0
  %94 = vmatpush1.msra.mxu0 0.0
  %95 = vmatprep.subr.mxu0 0.0
  %96 = vmatpush1.msra.mxu0 0.0
  %97 = vmatprep.subr.mxu0 0.0
  %98 = vmatpush1.msra.mxu0 0.0
  %99 = vmatprep.subr.mxu0 0.0
  %100 = vmatpush1.msra.mxu0 0.0
  %101 = vmatprep.subr.mxu0 0.0
  %102 = vmatpush1.msra.mxu0 0.0
  %103 = vmatprep.subr.mxu0 0.0
  %104 = vmatpush1.msra.mxu0 0.0
  %105 = vmatprep.subr.mxu0 0.0
  %106 = vmatpush1.msra.mxu0 0.0
  %107 = vmatprep.subr.mxu0 0.0
  %108 = vmatpush1.msra.mxu0 0.0
  %109 = vmatprep.subr.mxu0 0.0
  %110 = vmatpush1.msra.mxu0 0.0
  %111 = vmatprep.subr.mxu0 0.0
  %112 = vmatpush1.msra.mxu0 0.0
  %113 = vmatprep.subr.mxu0 0.0
  %114 = vmatpush1.msra.mxu0 0.0
  %115 = vmatprep.subr.mxu0 0.0
  %116 = vmatpush1.msra.mxu0 0.0
  %117 = vmatprep.subr.mxu0 0.0
  %118 = vmatpush1.msra.mxu0 0.0
  %119 = vmatprep.subr.mxu0 0.0
  %120 = vmatpush1.msra.mxu0 0.0
  %121 = vmatprep.subr.mxu0 0.0
  %122 = vmatpush1.msra.mxu0 0.0
  %123 = vmatprep.subr.mxu0 0.0
  %124 = vmatpush1.msra.mxu0 0.0
  %125 = vmatprep.subr.mxu0 0.0
  %126 = vmatpush1.msra.mxu0 0.0
  %127 = vmatprep.subr.mxu0 0.0
  %128 = vmatpush1.msra.mxu0 0.0
  %129 = vmatprep.subr.mxu0 0.0
  %130 = vmatpush1.msra.mxu0 0.0
  %131 = vmatprep.mubr.f32.mxu0 0.0
  %v132 = vand.u32 %v51, 4294901760
  %v133 = vsub.f32 %v51, %v132
  %v134 = vand.u32 %v133, 4294901760
  %v135 = vsub.f32 %v133, %v134
  %v136 = vand.u32 %v135, 4294901760
  %137 = vmatmul.mubr.f32.gmra.mrb[0].mxu0 %v136
  %v138 = vpop.f32.mrb[0].mxu0
  %v139 = vadd.f32 %v32, %v138
  %v140 = vpop.f32.mrb[0].mxu0
  %141 = vmatprep.mubr.f32.mxu0 0.0
  %v142 = vand.u32 %v54, 4294901760
  %v143 = vsub.f32 %v54, %v142
  %v144 = vand.u32 %v143, 4294901760
  %v145 = vsub.f32 %v143, %v144
  %v146 = vand.u32 %v145, 4294901760
  %147 = vmatmul.mubr.f32.gmra.mrb[0].mxu0 %v146
  %v148 = vpop.f32.mrb[0].mxu0
  %v149 = vadd.f32 %v37, %v148
  %v150 = vpop.f32.mrb[0].mxu0
  %151 = vmatprep.mubr.f32.mxu0 0.0
  %v152 = vand.u32 %v57, 4294901760
  %v153 = vsub.f32 %v57, %v152
  %v154 = vand.u32 %v153, 4294901760
  %v155 = vsub.f32 %v153, %v154
  %v156 = vand.u32 %v155, 4294901760
  %157 = vmatmul.mubr.f32.gmra.mrb[0].mxu0 %v156
  %v158 = vpop.f32.mrb[0].mxu0
  %v159 = vadd.f32 %v42, %v158
  %v160 = vpop.f32.mrb[0].mxu0
  %161 = vmatprep.mubr.f32.mxu0 0.0
  %v162 = vand.u32 %v60, 4294901760
  %v163 = vsub.f32 %v60, %v162
  %v164 = vand.u32 %v163, 4294901760
  %v165 = vsub.f32 %v163, %v164
  %v166 = vand.u32 %v165, 4294901760
  %167 = vmatmul.mubr.f32.gmra.mrb[0].mxu0 %v166
  %v168 = vpop.f32.mrb[0].mxu0
  %v169 = vadd.f32 %v47, %v168
  %v170 = vpop.f32.mrb[0].mxu0
  %171 = vdwg.mxu0
  %172 = vmatprep.subr.mxu0 0.0
  %v173 = vand.u32 %v64, 4294901760
  %v174 = vsub.f32 %v64, %v173
  %v175 = vand.u32 %v174, 4294901760
  %v176 = vsub.f32 %v174, %v175
  %v177 = vand.u32 %v176, 4294901760
  %178 = vmatpush1.msra.mxu0 %v177
  %179 = vmatprep.subr.mxu0 0.0
  %180 = vmatpush1.msra.mxu0 0.0
  %181 = vmatprep.subr.mxu0 0.0
  %182 = vmatpush1.msra.mxu0 0.0
  %183 = vmatprep.subr.mxu0 0.0
  %184 = vmatpush1.msra.mxu0 0.0
  %185 = vmatprep.subr.mxu0 0.0
  %186 = vmatpush1.msra.mxu0 0.0
  %187 = vmatprep.subr.mxu0 0.0
  %188 = vmatpush1.msra.mxu0 0.0
  %189 = vmatprep.subr.mxu0 0.0
  %190 = vmatpush1.msra.mxu0 0.0
  %191 = vmatprep.subr.mxu0 0.0
  %192 = vmatpush1.msra.mxu0 0.0
  %193 = vmatprep.subr.mxu0 0.0
  %194 = vmatpush1.msra.mxu0 0.0
  %195 = vmatprep.subr.mxu0 0.0
  %196 = vmatpush1.msra.mxu0 0.0
  %197 = vmatprep.subr.mxu0 0.0
  %198 = vmatpush1.msra.mxu0 0.0
  %199 = vmatprep.subr.mxu0 0.0
  %200 = vmatpush1.msra.mxu0 0.0
  %201 = vmatprep.subr.mxu0 0.0
  %202 = vmatpush1.msra.mxu0 0.0
  %203 = vmatprep.subr.mxu0 0.0
  %204 = vmatpush1.msra.mxu0 0.0
  %205 = vmatprep.subr.mxu0 0.0
  %206 = vmatpush1.msra.mxu0 0.0
  %207 = vmatprep.subr.mxu0 0.0
  %208 = vmatpush1.msra.mxu0 0.0
  %209 = vmatprep.subr.mxu0 0.0
  %210 = vmatpush1.msra.mxu0 0.0
  %211 = vmatprep.subr.mxu0 0.0
  %212 = vmatpush1.msra.mxu0 0.0
  %213 = vmatprep.subr.mxu0 0.0
  %214 = vmatpush1.msra.mxu0 0.0
  %215 = vmatprep.subr.mxu0 0.0
  %216 = vmatpush1.msra.mxu0 0.0
  %217 = vmatprep.subr.mxu0 0.0
  %218 = vmatpush1.msra.mxu0 0.0
  %219 = vmatprep.subr.mxu0 0.0
  %220 = vmatpush1.msra.mxu0 0.0
  %221 = vmatprep.subr.mxu0 0.0
  %222 = vmatpush1.msra.mxu0 0.0
  %223 = vmatprep.subr.mxu0 0.0
  %224 = vmatpush1.msra.mxu0 0.0
  %225 = vmatprep.subr.mxu0 0.0
  %226 = vmatpush1.msra.mxu0 0.0
  %227 = vmatprep.subr.mxu0 0.0
  %228 = vmatpush1.msra.mxu0 0.0
  %229 = vmatprep.subr.mxu0 0.0
  %230 = vmatpush1.msra.mxu0 0.0
  %231 = vmatprep.subr.mxu0 0.0
  %232 = vmatpush1.msra.mxu0 0.0
  %233 = vmatprep.subr.mxu0 0.0
  %234 = vmatpush1.msra.mxu0 0.0
  %235 = vmatprep.subr.mxu0 0.0
  %236 = vmatpush1.msra.mxu0 0.0
  %237 = vmatprep.subr.mxu0 0.0
  %238 = vmatpush1.msra.mxu0 0.0
  %239 = vmatprep.subr.mxu0 0.0
  %240 = vmatpush1.msra.mxu0 0.0
  %241 = vmatprep.mubr.f32.mxu0 0.0
  %v242 = vand.u32 %v51, 4294901760
  %243 = vmatmul.mubr.f32.gmra.mrb[0].mxu0 %v242
  %v244 = vpop.f32.mrb[0].mxu0
  %v245 = vadd.f32 %v139, %v244
  %v246 = vpop.f32.mrb[0].mxu0
  %247 = vmatprep.mubr.f32.mxu0 0.0
  %v248 = vand.u32 %v54, 4294901760
  %249 = vmatmul.mubr.f32.gmra.mrb[0].mxu0 %v248
  %v250 = vpop.f32.mrb[0].mxu0
  %v251 = vadd.f32 %v149, %v250
  %v252 = vpop.f32.mrb[0].mxu0
  %253 = vmatprep.mubr.f32.mxu0 0.0
  %v254 = vand.u32 %v57, 4294901760
  %255 = vmatmul.mubr.f32.gmra.mrb[0].mxu0 %v254
  %v256 = vpop.f32.mrb[0].mxu0
  %v257 = vadd.f32 %v159, %v256
  %v258 = vpop.f32.mrb[0].mxu0
  %259 = vmatprep.mubr.f32.mxu0 0.0
  %v260 = vand.u32 %v60, 4294901760
  %261 = vmatmul.mubr.f32.gmra.mrb[0].mxu0 %v260
  %v262 = vpop.f32.mrb[0].mxu0
  %v263 = vadd.f32 %v169, %v262
  %v264 = vpop.f32.mrb[0].mxu0
  %265 = vdwg.mxu0
  %266 = vmatprep.subr.mxu0 0.0
  %v267 = vand.u32 %v64, 4294901760
  %v268 = vsub.f32 %v64, %v267
  %269 = vmatpush1.msra.mxu0 %v268
  %270 = vmatprep.subr.mxu0 0.0
  %271 = vmatpush1.msra.mxu0 0.0
  %272 = vmatprep.subr.mxu0 0.0
  %273 = vmatpush1.msra.mxu0 0.0
  %274 = vmatprep.subr.mxu0 0.0
  %275 = vmatpush1.msra.mxu0 0.0
  %276 = vmatprep.subr.mxu0 0.0
  %277 = vmatpush1.msra.mxu0 0.0
  %278 = vmatprep.subr.mxu0 0.0
  %279 = vmatpush1.msra.mxu0 0.0
  %280 = vmatprep.subr.mxu0 0.0
  %281 = vmatpush1.msra.mxu0 0.0
  %282 = vmatprep.subr.mxu0 0.0
  %283 = vmatpush1.msra.mxu0 0.0
  %284 = vmatprep.subr.mxu0 0.0
  %285 = vmatpush1.msra.mxu0 0.0
  %286 = vmatprep.subr.mxu0 0.0
  %287 = vmatpush1.msra.mxu0 0.0
  %288 = vmatprep.subr.mxu0 0.0
  %289 = vmatpush1.msra.mxu0 0.0
  %290 = vmatprep.subr.mxu0 0.0
  %291 = vmatpush1.msra.mxu0 0.0
  %292 = vmatprep.subr.mxu0 0.0
  %293 = vmatpush1.msra.mxu0 0.0
  %294 = vmatprep.subr.mxu0 0.0
  %295 = vmatpush1.msra.mxu0 0.0
  %296 = vmatprep.subr.mxu0 0.0
  %297 = vmatpush1.msra.mxu0 0.0
  %298 = vmatprep.subr.mxu0 0.0
  %299 = vmatpush1.msra.mxu0 0.0
  %300 = vmatprep.subr.mxu0 0.0
  %301 = vmatpush1.msra.mxu0 0.0
  %302 = vmatprep.subr.mxu0 0.0
  %303 = vmatpush1.msra.mxu0 0.0
  %304 = vmatprep.subr.mxu0 0.0
  %305 = vmatpush1.msra.mxu0 0.0
  %306 = vmatprep.subr.mxu0 0.0
  %307 = vmatpush1.msra.mxu0 0.0
  %308 = vmatprep.subr.mxu0 0.0
  %309 = vmatpush1.msra.mxu0 0.0
  %310 = vmatprep.subr.mxu0 0.0
  %311 = vmatpush1.msra.mxu0 0.0
  %312 = vmatprep.subr.mxu0 0.0
  %313 = vmatpush1.msra.mxu0 0.0
  %314 = vmatprep.subr.mxu0 0.0
  %315 = vmatpush1.msra.mxu0 0.0
  %316 = vmatprep.subr.mxu0 0.0
  %317 = vmatpush1.msra.mxu0 0.0
  %318 = vmatprep.subr.mxu0 0.0
  %319 = vmatpush1.msra.mxu0 0.0
  %320 = vmatprep.subr.mxu0 0.0
  %321 = vmatpush1.msra.mxu0 0.0
  %322 = vmatprep.subr.mxu0 0.0
  %323 = vmatpush1.msra.mxu0 0.0
  %324 = vmatprep.subr.mxu0 0.0
  %325 = vmatpush1.msra.mxu0 0.0
  %326 = vmatprep.subr.mxu0 0.0
  %327 = vmatpush1.msra.mxu0 0.0
  %328 = vmatprep.subr.mxu0 0.0
  %329 = vmatpush1.msra.mxu0 0.0
  %330 = vmatprep.subr.mxu0 0.0
  %331 = vmatpush1.msra.mxu0 0.0
  %332 = vmatprep.mubr.f32.mxu0 0.0
  %v333 = vand.u32 %v51, 4294901760
  %v334 = vsub.f32 %v51, %v333
  %335 = vmatmul.mubr.f32.gmra.mrb[0].mxu0 %v334
  %v336 = vpop.f32.mrb[0].mxu0
  %v337 = vadd.f32 %v245, %v336
  %v338 = vpop.f32.mrb[0].mxu0
  %339 = vmatprep.mubr.f32.mxu0 0.0
  %v340 = vand.u32 %v54, 4294901760
  %v341 = vsub.f32 %v54, %v340
  %342 = vmatmul.mubr.f32.gmra.mrb[0].mxu0 %v341
  %v343 = vpop.f32.mrb[0].mxu0
  %v344 = vadd.f32 %v251, %v343
  %v345 = vpop.f32.mrb[0].mxu0
  %346 = vmatprep.mubr.f32.mxu0 0.0
  %v347 = vand.u32 %v57, 4294901760
  %v348 = vsub.f32 %v57, %v347
  %349 = vmatmul.mubr.f32.gmra.mrb[0].mxu0 %v348
  %v350 = vpop.f32.mrb[0].mxu0
  %v351 = vadd.f32 %v257, %v350
  %v352 = vpop.f32.mrb[0].mxu0
  %353 = vmatprep.mubr.f32.mxu0 0.0
  %v354 = vand.u32 %v60, 4294901760
  %v355 = vsub.f32 %v60, %v354
  %356 = vmatmul.mubr.f32.gmra.mrb[0].mxu0 %v355
  %v357 = vpop.f32.mrb[0].mxu0
  %v358 = vadd.f32 %v263, %v357
  %v359 = vpop.f32.mrb[0].mxu0
  %360 = vdwg.mxu0
  %361 = vmatprep.subr.mxu0 0.0
  %v362 = vand.u32 %v64, 4294901760
  %363 = vmatpush1.msra.mxu0 %v362
  %364 = vmatprep.subr.mxu0 0.0
  %365 = vmatpush1.msra.mxu0 0.0
  %366 = vmatprep.subr.mxu0 0.0
  %367 = vmatpush1.msra.mxu0 0.0
  %368 = vmatprep.subr.mxu0 0.0
  %369 = vmatpush1.msra.mxu0 0.0
  %370 = vmatprep.subr.mxu0 0.0
  %371 = vmatpush1.msra.mxu0 0.0
  %372 = vmatprep.subr.mxu0 0.0
  %373 = vmatpush1.msra.mxu0 0.0
  %374 = vmatprep.subr.mxu0 0.0
  %375 = vmatpush1.msra.mxu0 0.0
  %376 = vmatprep.subr.mxu0 0.0
  %377 = vmatpush1.msra.mxu0 0.0
  %378 = vmatprep.subr.mxu0 0.0
  %379 = vmatpush1.msra.mxu0 0.0
  %380 = vmatprep.subr.mxu0 0.0
  %381 = vmatpush1.msra.mxu0 0.0
  %382 = vmatprep.subr.mxu0 0.0
  %383 = vmatpush1.msra.mxu0 0.0
  %384 = vmatprep.subr.mxu0 0.0
  %385 = vmatpush1.msra.mxu0 0.0
  %386 = vmatprep.subr.mxu0 0.0
  %387 = vmatpush1.msra.mxu0 0.0
  %388 = vmatprep.subr.mxu0 0.0
  %389 = vmatpush1.msra.mxu0 0.0
  %390 = vmatprep.subr.mxu0 0.0
  %391 = vmatpush1.msra.mxu0 0.0
  %392 = vmatprep.subr.mxu0 0.0
  %393 = vmatpush1.msra.mxu0 0.0
  %394 = vmatprep.subr.mxu0 0.0
  %395 = vmatpush1.msra.mxu0 0.0
  %396 = vmatprep.subr.mxu0 0.0
  %397 = vmatpush1.msra.mxu0 0.0
  %398 = vmatprep.subr.mxu0 0.0
  %399 = vmatpush1.msra.mxu0 0.0
  %400 = vmatprep.subr.mxu0 0.0
  %401 = vmatpush1.msra.mxu0 0.0
  %402 = vmatprep.subr.mxu0 0.0
  %403 = vmatpush1.msra.mxu0 0.0
  %404 = vmatprep.subr.mxu0 0.0
  %405 = vmatpush1.msra.mxu0 0.0
  %406 = vmatprep.subr.mxu0 0.0
  %407 = vmatpush1.msra.mxu0 0.0
  %408 = vmatprep.subr.mxu0 0.0
  %409 = vmatpush1.msra.mxu0 0.0
  %410 = vmatprep.subr.mxu0 0.0
  %411 = vmatpush1.msra.mxu0 0.0
  %412 = vmatprep.subr.mxu0 0.0
  %413 = vmatpush1.msra.mxu0 0.0
  %414 = vmatprep.subr.mxu0 0.0
  %415 = vmatpush1.msra.mxu0 0.0
  %416 = vmatprep.subr.mxu0 0.0
  %417 = vmatpush1.msra.mxu0 0.0
  %418 = vmatprep.subr.mxu0 0.0
  %419 = vmatpush1.msra.mxu0 0.0
  %420 = vmatprep.subr.mxu0 0.0
  %421 = vmatpush1.msra.mxu0 0.0
  %422 = vmatprep.subr.mxu0 0.0
  %423 = vmatpush1.msra.mxu0 0.0
  %424 = vmatprep.subr.mxu0 0.0
  %425 = vmatpush1.msra.mxu0 0.0
  %426 = vmatprep.mubr.f32.mxu0 0.0
  %v427 = vand.u32 %v51, 4294901760
  %v428 = vsub.f32 %v51, %v427
  %v429 = vand.u32 %v428, 4294901760
  %430 = vmatmul.mubr.f32.gmra.mrb[0].mxu0 %v429
  %v431 = vpop.f32.mrb[0].mxu0
  %v432 = vadd.f32 %v337, %v431
  %v433 = vpop.f32.mrb[0].mxu0
  %434 = vmatprep.mubr.f32.mxu0 0.0
  %v435 = vand.u32 %v54, 4294901760
  %v436 = vsub.f32 %v54, %v435
  %v437 = vand.u32 %v436, 4294901760
  %438 = vmatmul.mubr.f32.gmra.mrb[0].mxu0 %v437
  %v439 = vpop.f32.mrb[0].mxu0
  %v440 = vadd.f32 %v344, %v439
  %v441 = vpop.f32.mrb[0].mxu0
  %442 = vmatprep.mubr.f32.mxu0 0.0
  %v443 = vand.u32 %v57, 4294901760
  %v444 = vsub.f32 %v57, %v443
  %v445 = vand.u32 %v444, 4294901760
  %446 = vmatmul.mubr.f32.gmra.mrb[0].mxu0 %v445
  %v447 = vpop.f32.mrb[0].mxu0
  %v448 = vadd.f32 %v351, %v447
  %v449 = vpop.f32.mrb[0].mxu0
  %450 = vmatprep.mubr.f32.mxu0 0.0
  %v451 = vand.u32 %v60, 4294901760
  %v452 = vsub.f32 %v60, %v451
  %v453 = vand.u32 %v452, 4294901760
  %454 = vmatmul.mubr.f32.gmra.mrb[0].mxu0 %v453
  %v455 = vpop.f32.mrb[0].mxu0
  %v456 = vadd.f32 %v358, %v455
  %v457 = vpop.f32.mrb[0].mxu0
  %458 = vdwg.mxu0
  %459 = vmatprep.subr.mxu0 0.0
  %v460 = vand.u32 %v64, 4294901760
  %v461 = vsub.f32 %v64, %v460
  %v462 = vand.u32 %v461, 4294901760
  %463 = vmatpush1.msra.mxu0 %v462
  %464 = vmatprep.subr.mxu0 0.0
  %465 = vmatpush1.msra.mxu0 0.0
  %466 = vmatprep.subr.mxu0 0.0
  %467 = vmatpush1.msra.mxu0 0.0
  %468 = vmatprep.subr.mxu0 0.0
  %469 = vmatpush1.msra.mxu0 0.0
  %470 = vmatprep.subr.mxu0 0.0
  %471 = vmatpush1.msra.mxu0 0.0
  %472 = vmatprep.subr.mxu0 0.0
  %473 = vmatpush1.msra.mxu0 0.0
  %474 = vmatprep.subr.mxu0 0.0
  %475 = vmatpush1.msra.mxu0 0.0
  %476 = vmatprep.subr.mxu0 0.0
  %477 = vmatpush1.msra.mxu0 0.0
  %478 = vmatprep.subr.mxu0 0.0
  %479 = vmatpush1.msra.mxu0 0.0
  %480 = vmatprep.subr.mxu0 0.0
  %481 = vmatpush1.msra.mxu0 0.0
  %482 = vmatprep.subr.mxu0 0.0
  %483 = vmatpush1.msra.mxu0 0.0
  %484 = vmatprep.subr.mxu0 0.0
  %485 = vmatpush1.msra.mxu0 0.0
  %486 = vmatprep.subr.mxu0 0.0
  %487 = vmatpush1.msra.mxu0 0.0
  %488 = vmatprep.subr.mxu0 0.0
  %489 = vmatpush1.msra.mxu0 0.0
  %490 = vmatprep.subr.mxu0 0.0
  %491 = vmatpush1.msra.mxu0 0.0
  %492 = vmatprep.subr.mxu0 0.0
  %493 = vmatpush1.msra.mxu0 0.0
  %494 = vmatprep.subr.mxu0 0.0
  %495 = vmatpush1.msra.mxu0 0.0
  %496 = vmatprep.subr.mxu0 0.0
  %497 = vmatpush1.msra.mxu0 0.0
  %498 = vmatprep.subr.mxu0 0.0
  %499 = vmatpush1.msra.mxu0 0.0
  %500 = vmatprep.subr.mxu0 0.0
  %501 = vmatpush1.msra.mxu0 0.0
  %502 = vmatprep.subr.mxu0 0.0
  %503 = vmatpush1.msra.mxu0 0.0
  %504 = vmatprep.subr.mxu0 0.0
  %505 = vmatpush1.msra.mxu0 0.0
  %506 = vmatprep.subr.mxu0 0.0
  %507 = vmatpush1.msra.mxu0 0.0
  %508 = vmatprep.subr.mxu0 0.0
  %509 = vmatpush1.msra.mxu0 0.0
  %510 = vmatprep.subr.mxu0 0.0
  %511 = vmatpush1.msra.mxu0 0.0
  %512 = vmatprep.subr.mxu0 0.0
  %513 = vmatpush1.msra.mxu0 0.0
  %514 = vmatprep.subr.mxu0 0.0
  %515 = vmatpush1.msra.mxu0 0.0
  %516 = vmatprep.subr.mxu0 0.0
  %517 = vmatpush1.msra.mxu0 0.0
  %518 = vmatprep.subr.mxu0 0.0
  %519 = vmatpush1.msra.mxu0 0.0
  %520 = vmatprep.subr.mxu0 0.0
  %521 = vmatpush1.msra.mxu0 0.0
  %522 = vmatprep.subr.mxu0 0.0
  %523 = vmatpush1.msra.mxu0 0.0
  %524 = vmatprep.subr.mxu0 0.0
  %525 = vmatpush1.msra.mxu0 0.0
  %526 = vmatprep.mubr.f32.mxu0 0.0
  %v527 = vand.u32 %v51, 4294901760
  %528 = vmatmul.mubr.f32.gmra.mrb[0].mxu0 %v527
  %v529 = vpop.f32.mrb[0].mxu0
  %v530 = vadd.f32 %v432, %v529
  %v531 = vpop.f32.mrb[0].mxu0
  %532 = vmatprep.mubr.f32.mxu0 0.0
  %v533 = vand.u32 %v54, 4294901760
  %534 = vmatmul.mubr.f32.gmra.mrb[0].mxu0 %v533
  %v535 = vpop.f32.mrb[0].mxu0
  %v536 = vadd.f32 %v440, %v535
  %v537 = vpop.f32.mrb[0].mxu0
  %538 = vmatprep.mubr.f32.mxu0 0.0
  %v539 = vand.u32 %v57, 4294901760
  %540 = vmatmul.mubr.f32.gmra.mrb[0].mxu0 %v539
  %v541 = vpop.f32.mrb[0].mxu0
  %v542 = vadd.f32 %v448, %v541
  %v543 = vpop.f32.mrb[0].mxu0
  %544 = vmatprep.mubr.f32.mxu0 0.0
  %v545 = vand.u32 %v60, 4294901760
  %546 = vmatmul.mubr.f32.gmra.mrb[0].mxu0 %v545
  %v547 = vpop.f32.mrb[0].mxu0
  %v548 = vadd.f32 %v456, %v547
  %v549 = vpop.f32.mrb[0].mxu0
  %550 = vdwg.mxu0
  %551 = vmatprep.subr.mxu0 0.0
  %v552 = vand.u32 %v64, 4294901760
  %553 = vmatpush1.msra.mxu0 %v552
  %554 = vmatprep.subr.mxu0 0.0
  %555 = vmatpush1.msra.mxu0 0.0
  %556 = vmatprep.subr.mxu0 0.0
  %557 = vmatpush1.msra.mxu0 0.0
  %558 = vmatprep.subr.mxu0 0.0
  %559 = vmatpush1.msra.mxu0 0.0
  %560 = vmatprep.subr.mxu0 0.0
  %561 = vmatpush1.msra.mxu0 0.0
  %562 = vmatprep.subr.mxu0 0.0
  %563 = vmatpush1.msra.mxu0 0.0
  %564 = vmatprep.subr.mxu0 0.0
  %565 = vmatpush1.msra.mxu0 0.0
  %566 = vmatprep.subr.mxu0 0.0
  %567 = vmatpush1.msra.mxu0 0.0
  %568 = vmatprep.subr.mxu0 0.0
  %569 = vmatpush1.msra.mxu0 0.0
  %570 = vmatprep.subr.mxu0 0.0
  %571 = vmatpush1.msra.mxu0 0.0
  %572 = vmatprep.subr.mxu0 0.0
  %573 = vmatpush1.msra.mxu0 0.0
  %574 = vmatprep.subr.mxu0 0.0
  %575 = vmatpush1.msra.mxu0 0.0
  %576 = vmatprep.subr.mxu0 0.0
  %577 = vmatpush1.msra.mxu0 0.0
  %578 = vmatprep.subr.mxu0 0.0
  %579 = vmatpush1.msra.mxu0 0.0
  %580 = vmatprep.subr.mxu0 0.0
  %581 = vmatpush1.msra.mxu0 0.0
  %582 = vmatprep.subr.mxu0 0.0
  %583 = vmatpush1.msra.mxu0 0.0
  %584 = vmatprep.subr.mxu0 0.0
  %585 = vmatpush1.msra.mxu0 0.0
  %586 = vmatprep.subr.mxu0 0.0
  %587 = vmatpush1.msra.mxu0 0.0
  %588 = vmatprep.subr.mxu0 0.0
  %589 = vmatpush1.msra.mxu0 0.0
  %590 = vmatprep.subr.mxu0 0.0
  %591 = vmatpush1.msra.mxu0 0.0
  %592 = vmatprep.subr.mxu0 0.0
  %593 = vmatpush1.msra.mxu0 0.0
  %594 = vmatprep.subr.mxu0 0.0
  %595 = vmatpush1.msra.mxu0 0.0
  %596 = vmatprep.subr.mxu0 0.0
  %597 = vmatpush1.msra.mxu0 0.0
  %598 = vmatprep.subr.mxu0 0.0
  %599 = vmatpush1.msra.mxu0 0.0
  %600 = vmatprep.subr.mxu0 0.0
  %601 = vmatpush1.msra.mxu0 0.0
  %602 = vmatprep.subr.mxu0 0.0
  %603 = vmatpush1.msra.mxu0 0.0
  %604 = vmatprep.subr.mxu0 0.0
  %605 = vmatpush1.msra.mxu0 0.0
  %606 = vmatprep.subr.mxu0 0.0
  %607 = vmatpush1.msra.mxu0 0.0
  %608 = vmatprep.subr.mxu0 0.0
  %609 = vmatpush1.msra.mxu0 0.0
  %610 = vmatprep.subr.mxu0 0.0
  %611 = vmatpush1.msra.mxu0 0.0
  %612 = vmatprep.subr.mxu0 0.0
  %613 = vmatpush1.msra.mxu0 0.0
  %614 = vmatprep.subr.mxu0 0.0
  %615 = vmatpush1.msra.mxu0 0.0
  %616 = vmatprep.mubr.f32.mxu0 0.0
  %v617 = vand.u32 %v51, 4294901760
  %618 = vmatmul.mubr.f32.gmra.mrb[0].mxu0 %v617
  %v619 = vpop.f32.mrb[0].mxu0
  %v620 = vadd.f32 %v530, %v619
  %v621 = vpop.f32.mrb[0].mxu0
  %622 = vmatprep.mubr.f32.mxu0 0.0
  %v623 = vand.u32 %v54, 4294901760
  %624 = vmatmul.mubr.f32.gmra.mrb[0].mxu0 %v623
  %v625 = vpop.f32.mrb[0].mxu0
  %v626 = vadd.f32 %v536, %v625
  %v627 = vpop.f32.mrb[0].mxu0
  %628 = vmatprep.mubr.f32.mxu0 0.0
  %v629 = vand.u32 %v57, 4294901760
  %630 = vmatmul.mubr.f32.gmra.mrb[0].mxu0 %v629
  %v631 = vpop.f32.mrb[0].mxu0
  %v632 = vadd.f32 %v542, %v631
  %v633 = vpop.f32.mrb[0].mxu0
  %634 = vmatprep.mubr.f32.mxu0 0.0
  %v635 = vand.u32 %v60, 4294901760
  %636 = vmatmul.mubr.f32.gmra.mrb[0].mxu0 %v635
  %v637 = vpop.f32.mrb[0].mxu0
  %v638 = vadd.f32 %v548, %v637
  %v639 = vpop.f32.mrb[0].mxu0
  %640 = vdwg.mxu0
  %v641 = vmax.f32 %v620, 0.0
  %v642 = vmax.f32 %v626, 0.0
  %v643 = vmax.f32 %v632, 0.0
  %v644 = vmax.f32 %v638, 0.0
  %v645 = vld [vmem:[%s3] sm:$0x3]
  %v646 = vld [vmem:[%s4] sm:$0x3]
  %648 = vset.pattern.permute.xlu0 0
  %649 = vperm.xlu0 %648, %v646
  %v650 = vpop.permute.xlu0 %649
  %vm652 = vcmask 203776
  %v654 = vsel %vm652, %v645, 0
  %vm656 = vcmask 1040384
  %v658 = vsel %vm656, %v644, 0
  %660 = vmatprep.subr.mxu0 0.0
  %v661 = vand.u32 %v641, 4294901760
  %662 = vmatpush1.msra.mxu0 %v661
  %663 = vmatprep.subr.mxu0 0.0
  %v664 = vand.u32 %v642, 4294901760
  %665 = vmatpush1.msra.mxu0 %v664
  %666 = vmatprep.subr.mxu0 0.0
  %v667 = vand.u32 %v643, 4294901760
  %668 = vmatpush1.msra.mxu0 %v667
  %669 = vmatprep.subr.mxu0 0.0
  %v670 = vand.u32 %v658, 4294901760
  %671 = vmatpush1.msra.mxu0 %v670
  %672 = vmatprep.subr.mxu0 0.0
  %673 = vmatpush1.msra.mxu0 0.0
  %674 = vmatprep.subr.mxu0 0.0
  %675 = vmatpush1.msra.mxu0 0.0
  %676 = vmatprep.subr.mxu0 0.0
  %677 = vmatpush1.msra.mxu0 0.0
  %678 = vmatprep.subr.mxu0 0.0
  %679 = vmatpush1.msra.mxu0 0.0
  %680 = vmatprep.subr.mxu0 0.0
  %681 = vmatpush1.msra.mxu0 0.0
  %682 = vmatprep.subr.mxu0 0.0
  %683 = vmatpush1.msra.mxu0 0.0
  %684 = vmatprep.subr.mxu0 0.0
  %685 = vmatpush1.msra.mxu0 0.0
  %686 = vmatprep.subr.mxu0 0.0
  %687 = vmatpush1.msra.mxu0 0.0
  %688 = vmatprep.subr.mxu0 0.0
  %689 = vmatpush1.msra.mxu0 0.0
  %690 = vmatprep.subr.mxu0 0.0
  %691 = vmatpush1.msra.mxu0 0.0
  %692 = vmatprep.subr.mxu0 0.0
  %693 = vmatpush1.msra.mxu0 0.0
  %694 = vmatprep.subr.mxu0 0.0
  %695 = vmatpush1.msra.mxu0 0.0
  %696 = vmatprep.subr.mxu0 0.0
  %697 = vmatpush1.msra.mxu0 0.0
  %698 = vmatprep.subr.mxu0 0.0
  %699 = vmatpush1.msra.mxu0 0.0
  %700 = vmatprep.subr.mxu0 0.0
  %701 = vmatpush1.msra.mxu0 0.0
  %702 = vmatprep.subr.mxu0 0.0
  %703 = vmatpush1.msra.mxu0 0.0
  %704 = vmatprep.subr.mxu0 0.0
  %705 = vmatpush1.msra.mxu0 0.0
  %706 = vmatprep.subr.mxu0 0.0
  %707 = vmatpush1.msra.mxu0 0.0
  %708 = vmatprep.subr.mxu0 0.0
  %709 = vmatpush1.msra.mxu0 0.0
  %710 = vmatprep.subr.mxu0 0.0
  %711 = vmatpush1.msra.mxu0 0.0
  %712 = vmatprep.subr.mxu0 0.0
  %713 = vmatpush1.msra.mxu0 0.0
  %714 = vmatprep.subr.mxu0 0.0
  %715 = vmatpush1.msra.mxu0 0.0
  %716 = vmatprep.subr.mxu0 0.0
  %717 = vmatpush1.msra.mxu0 0.0
  %718 = vmatprep.subr.mxu0 0.0
  %719 = vmatpush1.msra.mxu0 0.0
  %720 = vmatprep.subr.mxu0 0.0
  %721 = vmatpush1.msra.mxu0 0.0
  %722 = vmatprep.subr.mxu0 0.0
  %723 = vmatpush1.msra.mxu0 0.0
  %724 = vmatprep.subr.mxu0 0.0
  %725 = vmatpush1.msra.mxu0 0.0
  %726 = vmatprep.subr.mxu0 0.0
  %727 = vmatpush1.msra.mxu0 0.0
  %728 = vmatprep.mubr.f32.mxu0 0.0
  %v729 = vand.u32 %v654, 4294901760
  %v730 = vsub.f32 %v654, %v729
  %v731 = vand.u32 %v730, 4294901760
  %v732 = vsub.f32 %v730, %v731
  %v733 = vand.u32 %v732, 4294901760
  %734 = vmatmul.mubr.f32.gmra.mrb[0].mxu0 %v733
  %v735 = vpop.f32.mrb[0].mxu0
  %v736 = vadd.f32 %v650, %v735
  %v737 = vpop.f32.mrb[0].mxu0
  %738 = vdwg.mxu0
  %739 = vmatprep.subr.mxu0 0.0
  %v740 = vand.u32 %v641, 4294901760
  %v741 = vsub.f32 %v641, %v740
  %v742 = vand.u32 %v741, 4294901760
  %v743 = vsub.f32 %v741, %v742
  %v744 = vand.u32 %v743, 4294901760
  %745 = vmatpush1.msra.mxu0 %v744
  %746 = vmatprep.subr.mxu0 0.0
  %v747 = vand.u32 %v642, 4294901760
  %v748 = vsub.f32 %v642, %v747
  %v749 = vand.u32 %v748, 4294901760
  %v750 = vsub.f32 %v748, %v749
  %v751 = vand.u32 %v750, 4294901760
  %752 = vmatpush1.msra.mxu0 %v751
  %753 = vmatprep.subr.mxu0 0.0
  %v754 = vand.u32 %v643, 4294901760
  %v755 = vsub.f32 %v643, %v754
  %v756 = vand.u32 %v755, 4294901760
  %v757 = vsub.f32 %v755, %v756
  %v758 = vand.u32 %v757, 4294901760
  %759 = vmatpush1.msra.mxu0 %v758
  %760 = vmatprep.subr.mxu0 0.0
  %v761 = vand.u32 %v658, 4294901760
  %v762 = vsub.f32 %v658, %v761
  %v763 = vand.u32 %v762, 4294901760
  %v764 = vsub.f32 %v762, %v763
  %v765 = vand.u32 %v764, 4294901760
  %766 = vmatpush1.msra.mxu0 %v765
  %767 = vmatprep.subr.mxu0 0.0
  %768 = vmatpush1.msra.mxu0 0.0
  %769 = vmatprep.subr.mxu0 0.0
  %770 = vmatpush1.msra.mxu0 0.0
  %771 = vmatprep.subr.mxu0 0.0
  %772 = vmatpush1.msra.mxu0 0.0
  %773 = vmatprep.subr.mxu0 0.0
  %774 = vmatpush1.msra.mxu0 0.0
  %775 = vmatprep.subr.mxu0 0.0
  %776 = vmatpush1.msra.mxu0 0.0
  %777 = vmatprep.subr.mxu0 0.0
  %778 = vmatpush1.msra.mxu0 0.0
  %779 = vmatprep.subr.mxu0 0.0
  %780 = vmatpush1.msra.mxu0 0.0
  %781 = vmatprep.subr.mxu0 0.0
  %782 = vmatpush1.msra.mxu0 0.0
  %783 = vmatprep.subr.mxu0 0.0
  %784 = vmatpush1.msra.mxu0 0.0
  %785 = vmatprep.subr.mxu0 0.0
  %786 = vmatpush1.msra.mxu0 0.0
  %787 = vmatprep.subr.mxu0 0.0
  %788 = vmatpush1.msra.mxu0 0.0
  %789 = vmatprep.subr.mxu0 0.0
  %790 = vmatpush1.msra.mxu0 0.0
  %791 = vmatprep.subr.mxu0 0.0
  %792 = vmatpush1.msra.mxu0 0.0
  %793 = vmatprep.subr.mxu0 0.0
  %794 = vmatpush1.msra.mxu0 0.0
  %795 = vmatprep.subr.mxu0 0.0
  %796 = vmatpush1.msra.mxu0 0.0
  %797 = vmatprep.subr.mxu0 0.0
  %798 = vmatpush1.msra.mxu0 0.0
  %799 = vmatprep.subr.mxu0 0.0
  %800 = vmatpush1.msra.mxu0 0.0
  %801 = vmatprep.subr.mxu0 0.0
  %802 = vmatpush1.msra.mxu0 0.0
  %803 = vmatprep.subr.mxu0 0.0
  %804 = vmatpush1.msra.mxu0 0.0
  %805 = vmatprep.subr.mxu0 0.0
  %806 = vmatpush1.msra.mxu0 0.0
  %807 = vmatprep.subr.mxu0 0.0
  %808 = vmatpush1.msra.mxu0 0.0
  %809 = vmatprep.subr.mxu0 0.0
  %810 = vmatpush1.msra.mxu0 0.0
  %811 = vmatprep.subr.mxu0 0.0
  %812 = vmatpush1.msra.mxu0 0.0
  %813 = vmatprep.subr.mxu0 0.0
  %814 = vmatpush1.msra.mxu0 0.0
  %815 = vmatprep.subr.mxu0 0.0
  %816 = vmatpush1.msra.mxu0 0.0
  %817 = vmatprep.subr.mxu0 0.0
  %818 = vmatpush1.msra.mxu0 0.0
  %819 = vmatprep.subr.mxu0 0.0
  %820 = vmatpush1.msra.mxu0 0.0
  %821 = vmatprep.subr.mxu0 0.0
  %822 = vmatpush1.msra.mxu0 0.0
  %823 = vmatprep.mubr.f32.mxu0 0.0
  %v824 = vand.u32 %v654, 4294901760
  %825 = vmatmul.mubr.f32.gmra.mrb[0].mxu0 %v824
  %v826 = vpop.f32.mrb[0].mxu0
  %v827 = vadd.f32 %v736, %v826
  %v828 = vpop.f32.mrb[0].mxu0
  %829 = vdwg.mxu0
  %830 = vmatprep.subr.mxu0 0.0
  %v831 = vand.u32 %v641, 4294901760
  %v832 = vsub.f32 %v641, %v831
  %833 = vmatpush1.msra.mxu0 %v832
  %834 = vmatprep.subr.mxu0 0.0
  %v835 = vand.u32 %v642, 4294901760
  %v836 = vsub.f32 %v642, %v835
  %837 = vmatpush1.msra.mxu0 %v836
  %838 = vmatprep.subr.mxu0 0.0
  %v839 = vand.u32 %v643, 4294901760
  %v840 = vsub.f32 %v643, %v839
  %841 = vmatpush1.msra.mxu0 %v840
  %842 = vmatprep.subr.mxu0 0.0
  %v843 = vand.u32 %v658, 4294901760
  %v844 = vsub.f32 %v658, %v843
  %845 = vmatpush1.msra.mxu0 %v844
  %846 = vmatprep.subr.mxu0 0.0
  %847 = vmatpush1.msra.mxu0 0.0
  %848 = vmatprep.subr.mxu0 0.0
  %849 = vmatpush1.msra.mxu0 0.0
  %850 = vmatprep.subr.mxu0 0.0
  %851 = vmatpush1.msra.mxu0 0.0
  %852 = vmatprep.subr.mxu0 0.0
  %853 = vmatpush1.msra.mxu0 0.0
  %854 = vmatprep.subr.mxu0 0.0
  %855 = vmatpush1.msra.mxu0 0.0
  %856 = vmatprep.subr.mxu0 0.0
  %857 = vmatpush1.msra.mxu0 0.0
  %858 = vmatprep.subr.mxu0 0.0
  %859 = vmatpush1.msra.mxu0 0.0
  %860 = vmatprep.subr.mxu0 0.0
  %861 = vmatpush1.msra.mxu0 0.0
  %862 = vmatprep.subr.mxu0 0.0
  %863 = vmatpush1.msra.mxu0 0.0
  %864 = vmatprep.subr.mxu0 0.0
  %865 = vmatpush1.msra.mxu0 0.0
  %866 = vmatprep.subr.mxu0 0.0
  %867 = vmatpush1.msra.mxu0 0.0
  %868 = vmatprep.subr.mxu0 0.0
  %869 = vmatpush1.msra.mxu0 0.0
  %870 = vmatprep.subr.mxu0 0.0
  %871 = vmatpush1.msra.mxu0 0.0
  %872 = vmatprep.subr.mxu0 0.0
  %873 = vmatpush1.msra.mxu0 0.0
  %874 = vmatprep.subr.mxu0 0.0
  %875 = vmatpush1.msra.mxu0 0.0
  %876 = vmatprep.subr.mxu0 0.0
  %877 = vmatpush1.msra.mxu0 0.0
  %878 = vmatprep.subr.mxu0 0.0
  %879 = vmatpush1.msra.mxu0 0.0
  %880 = vmatprep.subr.mxu0 0.0
  %881 = vmatpush1.msra.mxu0 0.0
  %882 = vmatprep.subr.mxu0 0.0
  %883 = vmatpush1.msra.mxu0 0.0
  %884 = vmatprep.subr.mxu0 0.0
  %885 = vmatpush1.msra.mxu0 0.0
  %886 = vmatprep.subr.mxu0 0.0
  %887 = vmatpush1.msra.mxu0 0.0
  %888 = vmatprep.subr.mxu0 0.0
  %889 = vmatpush1.msra.mxu0 0.0
  %890 = vmatprep.subr.mxu0 0.0
  %891 = vmatpush1.msra.mxu0 0.0
  %892 = vmatprep.subr.mxu0 0.0
  %893 = vmatpush1.msra.mxu0 0.0
  %894 = vmatprep.subr.mxu0 0.0
  %895 = vmatpush1.msra.mxu0 0.0
  %896 = vmatprep.subr.mxu0 0.0
  %897 = vmatpush1.msra.mxu0 0.0
  %898 = vmatprep.subr.mxu0 0.0
  %899 = vmatpush1.msra.mxu0 0.0
  %900 = vmatprep.subr.mxu0 0.0
  %901 = vmatpush1.msra.mxu0 0.0
  %902 = vmatprep.mubr.f32.mxu0 0.0
  %v903 = vand.u32 %v654, 4294901760
  %v904 = vsub.f32 %v654, %v903
  %905 = vmatmul.mubr.f32.gmra.mrb[0].mxu0 %v904
  %v906 = vpop.f32.mrb[0].mxu0
  %v907 = vadd.f32 %v827, %v906
  %v908 = vpop.f32.mrb[0].mxu0
  %909 = vdwg.mxu0
  %910 = vmatprep.subr.mxu0 0.0
  %v911 = vand.u32 %v641, 4294901760
  %912 = vmatpush1.msra.mxu0 %v911
  %913 = vmatprep.subr.mxu0 0.0
  %v914 = vand.u32 %v642, 4294901760
  %915 = vmatpush1.msra.mxu0 %v914
  %916 = vmatprep.subr.mxu0 0.0
  %v917 = vand.u32 %v643, 4294901760
  %918 = vmatpush1.msra.mxu0 %v917
  %919 = vmatprep.subr.mxu0 0.0
  %v920 = vand.u32 %v658, 4294901760
  %921 = vmatpush1.msra.mxu0 %v920
  %922 = vmatprep.subr.mxu0 0.0
  %923 = vmatpush1.msra.mxu0 0.0
  %924 = vmatprep.subr.mxu0 0.0
  %925 = vmatpush1.msra.mxu0 0.0
  %926 = vmatprep.subr.mxu0 0.0
  %927 = vmatpush1.msra.mxu0 0.0
  %928 = vmatprep.subr.mxu0 0.0
  %929 = vmatpush1.msra.mxu0 0.0
  %930 = vmatprep.subr.mxu0 0.0
  %931 = vmatpush1.msra.mxu0 0.0
  %932 = vmatprep.subr.mxu0 0.0
  %933 = vmatpush1.msra.mxu0 0.0
  %934 = vmatprep.subr.mxu0 0.0
  %935 = vmatpush1.msra.mxu0 0.0
  %936 = vmatprep.subr.mxu0 0.0
  %937 = vmatpush1.msra.mxu0 0.0
  %938 = vmatprep.subr.mxu0 0.0
  %939 = vmatpush1.msra.mxu0 0.0
  %940 = vmatprep.subr.mxu0 0.0
  %941 = vmatpush1.msra.mxu0 0.0
  %942 = vmatprep.subr.mxu0 0.0
  %943 = vmatpush1.msra.mxu0 0.0
  %944 = vmatprep.subr.mxu0 0.0
  %945 = vmatpush1.msra.mxu0 0.0
  %946 = vmatprep.subr.mxu0 0.0
  %947 = vmatpush1.msra.mxu0 0.0
  %948 = vmatprep.subr.mxu0 0.0
  %949 = vmatpush1.msra.mxu0 0.0
  %950 = vmatprep.subr.mxu0 0.0
  %951 = vmatpush1.msra.mxu0 0.0
  %952 = vmatprep.subr.mxu0 0.0
  %953 = vmatpush1.msra.mxu0 0.0
  %954 = vmatprep.subr.mxu0 0.0
  %955 = vmatpush1.msra.mxu0 0.0
  %956 = vmatprep.subr.mxu0 0.0
  %957 = vmatpush1.msra.mxu0 0.0
  %958 = vmatprep.subr.mxu0 0.0
  %959 = vmatpush1.msra.mxu0 0.0
  %960 = vmatprep.subr.mxu0 0.0
  %961 = vmatpush1.msra.mxu0 0.0
  %962 = vmatprep.subr.mxu0 0.0
  %963 = vmatpush1.msra.mxu0 0.0
  %964 = vmatprep.subr.mxu0 0.0
  %965 = vmatpush1.msra.mxu0 0.0
  %966 = vmatprep.subr.mxu0 0.0
  %967 = vmatpush1.msra.mxu0 0.0
  %968 = vmatprep.subr.mxu0 0.0
  %969 = vmatpush1.msra.mxu0 0.0
  %970 = vmatprep.subr.mxu0 0.0
  %971 = vmatpush1.msra.mxu0 0.0
  %972 = vmatprep.subr.mxu0 0.0
  %973 = vmatpush1.msra.mxu0 0.0
  %974 = vmatprep.subr.mxu0 0.0
  %975 = vmatpush1.msra.mxu0 0.0
  %976 = vmatprep.subr.mxu0 0.0
  %977 = vmatpush1.msra.mxu0 0.0
  %978 = vmatprep.mubr.f32.mxu0 0.0
  %v979 = vand.u32 %v654, 4294901760
  %v980 = vsub.f32 %v654, %v979
  %v981 = vand.u32 %v980, 4294901760
  %982 = vmatmul.mubr.f32.gmra.mrb[0].mxu0 %v981
  %v983 = vpop.f32.mrb[0].mxu0
  %v984 = vadd.f32 %v907, %v983
  %v985 = vpop.f32.mrb[0].mxu0
  %986 = vdwg.mxu0
  %987 = vmatprep.subr.mxu0 0.0
  %v988 = vand.u32 %v641, 4294901760
  %v989 = vsub.f32 %v641, %v988
  %v990 = vand.u32 %v989, 4294901760
  %991 = vmatpush1.msra.mxu0 %v990
  %992 = vmatprep.subr.mxu0 0.0
  %v993 = vand.u32 %v642, 4294901760
  %v994 = vsub.f32 %v642, %v993
  %v995 = vand.u32 %v994, 4294901760
  %996 = vmatpush1.msra.mxu0 %v995
  %997 = vmatprep.subr.mxu0 0.0
  %v998 = vand.u32 %v643, 4294901760
  %v999 = vsub.f32 %v643, %v998
  %v1000 = vand.u32 %v999, 4294901760
  %1001 = vmatpush1.msra.mxu0 %v1000
  %1002 = vmatprep.subr.mxu0 0.0
  %v1003 = vand.u32 %v658, 4294901760
  %v1004 = vsub.f32 %v658, %v1003
  %v1005 = vand.u32 %v1004, 4294901760
  %1006 = vmatpush1.msra.mxu0 %v1005
  %1007 = vmatprep.subr.mxu0 0.0
  %1008 = vmatpush1.msra.mxu0 0.0
  %1009 = vmatprep.subr.mxu0 0.0
  %1010 = vmatpush1.msra.mxu0 0.0
  %1011 = vmatprep.subr.mxu0 0.0
  %1012 = vmatpush1.msra.mxu0 0.0
  %1013 = vmatprep.subr.mxu0 0.0
  %1014 = vmatpush1.msra.mxu0 0.0
  %1015 = vmatprep.subr.mxu0 0.0
  %1016 = vmatpush1.msra.mxu0 0.0
  %1017 = vmatprep.subr.mxu0 0.0
  %1018 = vmatpush1.msra.mxu0 0.0
  %1019 = vmatprep.subr.mxu0 0.0
  %1020 = vmatpush1.msra.mxu0 0.0
  %1021 = vmatprep.subr.mxu0 0.0
  %1022 = vmatpush1.msra.mxu0 0.0
  %1023 = vmatprep.subr.mxu0 0.0
  %1024 = vmatpush1.msra.mxu0 0.0
  %1025 = vmatprep.subr.mxu0 0.0
  %1026 = vmatpush1.msra.mxu0 0.0
  %1027 = vmatprep.subr.mxu0 0.0
  %1028 = vmatpush1.msra.mxu0 0.0
  %1029 = vmatprep.subr.mxu0 0.0
  %1030 = vmatpush1.msra.mxu0 0.0
  %1031 = vmatprep.subr.mxu0 0.0
  %1032 = vmatpush1.msra.mxu0 0.0
  %1033 = vmatprep.subr.mxu0 0.0
  %1034 = vmatpush1.msra.mxu0 0.0
  %1035 = vmatprep.subr.mxu0 0.0
  %1036 = vmatpush1.msra.mxu0 0.0
  %1037 = vmatprep.subr.mxu0 0.0
  %1038 = vmatpush1.msra.mxu0 0.0
  %1039 = vmatprep.subr.mxu0 0.0
  %1040 = vmatpush1.msra.mxu0 0.0
  %1041 = vmatprep.subr.mxu0 0.0
  %1042 = vmatpush1.msra.mxu0 0.0
  %1043 = vmatprep.subr.mxu0 0.0
  %1044 = vmatpush1.msra.mxu0 0.0
  %1045 = vmatprep.subr.mxu0 0.0
  %1046 = vmatpush1.msra.mxu0 0.0
  %1047 = vmatprep.subr.mxu0 0.0
  %1048 = vmatpush1.msra.mxu0 0.0
  %1049 = vmatprep.subr.mxu0 0.0
  %1050 = vmatpush1.msra.mxu0 0.0
  %1051 = vmatprep.subr.mxu0 0.0
  %1052 = vmatpush1.msra.mxu0 0.0
  %1053 = vmatprep.subr.mxu0 0.0
  %1054 = vmatpush1.msra.mxu0 0.0
  %1055 = vmatprep.subr.mxu0 0.0
  %1056 = vmatpush1.msra.mxu0 0.0
  %1057 = vmatprep.subr.mxu0 0.0
  %1058 = vmatpush1.msra.mxu0 0.0
  %1059 = vmatprep.subr.mxu0 0.0
  %1060 = vmatpush1.msra.mxu0 0.0
  %1061 = vmatprep.subr.mxu0 0.0
  %1062 = vmatpush1.msra.mxu0 0.0
  %1063 = vmatprep.mubr.f32.mxu0 0.0
  %v1064 = vand.u32 %v654, 4294901760
  %1065 = vmatmul.mubr.f32.gmra.mrb[0].mxu0 %v1064
  %v1066 = vpop.f32.mrb[0].mxu0
  %v1067 = vadd.f32 %v984, %v1066
  %v1068 = vpop.f32.mrb[0].mxu0
  %1069 = vdwg.mxu0
  %1070 = vmatprep.subr.mxu0 0.0
  %v1071 = vand.u32 %v641, 4294901760
  %1072 = vmatpush1.msra.mxu0 %v1071
  %1073 = vmatprep.subr.mxu0 0.0
  %v1074 = vand.u32 %v642, 4294901760
  %1075 = vmatpush1.msra.mxu0 %v1074
  %1076 = vmatprep.subr.mxu0 0.0
  %v1077 = vand.u32 %v643, 4294901760
  %1078 = vmatpush1.msra.mxu0 %v1077
  %1079 = vmatprep.subr.mxu0 0.0
  %v1080 = vand.u32 %v658, 4294901760
  %1081 = vmatpush1.msra.mxu0 %v1080
  %1082 = vmatprep.subr.mxu0 0.0
  %1083 = vmatpush1.msra.mxu0 0.0
  %1084 = vmatprep.subr.mxu0 0.0
  %1085 = vmatpush1.msra.mxu0 0.0
  %1086 = vmatprep.subr.mxu0 0.0
  %1087 = vmatpush1.msra.mxu0 0.0
  %1088 = vmatprep.subr.mxu0 0.0
  %1089 = vmatpush1.msra.mxu0 0.0
  %1090 = vmatprep.subr.mxu0 0.0
  %1091 = vmatpush1.msra.mxu0 0.0
  %1092 = vmatprep.subr.mxu0 0.0
  %1093 = vmatpush1.msra.mxu0 0.0
  %1094 = vmatprep.subr.mxu0 0.0
  %1095 = vmatpush1.msra.mxu0 0.0
  %1096 = vmatprep.subr.mxu0 0.0
  %1097 = vmatpush1.msra.mxu0 0.0
  %1098 = vmatprep.subr.mxu0 0.0
  %1099 = vmatpush1.msra.mxu0 0.0
  %1100 = vmatprep.subr.mxu0 0.0
  %1101 = vmatpush1.msra.mxu0 0.0
  %1102 = vmatprep.subr.mxu0 0.0
  %1103 = vmatpush1.msra.mxu0 0.0
  %1104 = vmatprep.subr.mxu0 0.0
  %1105 = vmatpush1.msra.mxu0 0.0
  %1106 = vmatprep.subr.mxu0 0.0
  %1107 = vmatpush1.msra.mxu0 0.0
  %1108 = vmatprep.subr.mxu0 0.0
  %1109 = vmatpush1.msra.mxu0 0.0
  %1110 = vmatprep.subr.mxu0 0.0
  %1111 = vmatpush1.msra.mxu0 0.0
  %1112 = vmatprep.subr.mxu0 0.0
  %1113 = vmatpush1.msra.mxu0 0.0
  %1114 = vmatprep.subr.mxu0 0.0
  %1115 = vmatpush1.msra.mxu0 0.0
  %1116 = vmatprep.subr.mxu0 0.0
  %1117 = vmatpush1.msra.mxu0 0.0
  %1118 = vmatprep.subr.mxu0 0.0
  %1119 = vmatpush1.msra.mxu0 0.0
  %1120 = vmatprep.subr.mxu0 0.0
  %1121 = vmatpush1.msra.mxu0 0.0
  %1122 = vmatprep.subr.mxu0 0.0
  %1123 = vmatpush1.msra.mxu0 0.0
  %1124 = vmatprep.subr.mxu0 0.0
  %1125 = vmatpush1.msra.mxu0 0.0
  %1126 = vmatprep.subr.mxu0 0.0
  %1127 = vmatpush1.msra.mxu0 0.0
  %1128 = vmatprep.subr.mxu0 0.0
  %1129 = vmatpush1.msra.mxu0 0.0
  %1130 = vmatprep.subr.mxu0 0.0
  %1131 = vmatpush1.msra.mxu0 0.0
  %1132 = vmatprep.subr.mxu0 0.0
  %1133 = vmatpush1.msra.mxu0 0.0
  %1134 = vmatprep.subr.mxu0 0.0
  %1135 = vmatpush1.msra.mxu0 0.0
  %1136 = vmatprep.subr.mxu0 0.0
  %1137 = vmatpush1.msra.mxu0 0.0
  %1138 = vmatprep.mubr.f32.mxu0 0.0
  %v1139 = vand.u32 %v654, 4294901760
  %1140 = vmatmul.mubr.f32.gmra.mrb[0].mxu0 %v1139
  %v1141 = vpop.f32.mrb[0].mxu0
  %v1142 = vadd.f32 %v1067, %v1141
  %v1143 = vpop.f32.mrb[0].mxu0
  %1144 = vdwg.mxu0
  %1145 = vst [vmem:[%s5] sm:$0x3] %v1142
  // Predicated region
  $region22: #{trajectory_neural_net.1} parent=0 // pred_check
    _
  $region23: #{trajectory_neural_net.1} parent=0 // pred_check_branch
    %1147 = sbr.rel (0) target = $region25
  $region24: #{trajectory_neural_net.1} parent=0 // pred_region
    _
  $region25: #{trajectory_neural_net.1} parent=0 // pred_fallthru
    _
  // Predicated region
  $region26: #{trajectory_neural_net.1} parent=0 // pred_check
    _
  $region27: #{trajectory_neural_net.1} parent=0 // pred_check_branch
    %1149 = sbr.rel (0) target = $region29
  $region28: #{trajectory_neural_net.1} parent=0 // pred_region
    _
  $region29: #{trajectory_neural_net.1} parent=0 // pred_fallthru
    _

</llo_original>
